<compile_context>
chip_gen: v5e
topology: v5e:2x2
jax: 0.10.0
libtpu: 0.0.40
codegen_flags: <defaults>
</compile_context>

<pallas_src>
import jax
import jax.numpy as jnp
from jax.experimental import pallas as pl
from jax.experimental.pallas import tpu as pltpu


def _pick_batch_fold(N, L, target_cols=512):
    """How many batch elements to fold into the lane axis per grid step.

    Tiles must either span the full folded axis or be 128-lane aligned
    (BlockSpec divisibility rule); prefer ~target_cols lanes per step.
    """
    if N * L <= target_cols:
        return N
    best = None
    for d in range(1, N + 1):
        if N % d == 0 and d * L <= target_cols and (d * L) % 128 == 0:
            best = d
    # Fallback: single tile covering everything (always legal).
    # TODO(synk): for very large N*L re-derive this cap against the 64 MiB
    # v7x VMEM budget and set pltpu.CompilerParams(vmem_limit_bytes=...).
    return best if best is not None else N


def make_phase_aware_conv1d(C_in, C_out, K=11, pad=5,
                            compute_dtype=jnp.bfloat16):
    """Returns forward(x, w_real, w_imag, b_real, b_imag) -> (N, C_out, L)."""

    def forward(x, w_real, w_imag, b_real, b_imag):
        N, _, L = x.shape
        nb = _pick_batch_fold(N, L)
        NL = nb * L                      # lane width of one grid step
        grid = (N // nb,)

        def kernel(x_ref, w_ref, b_ref, out_ref):
            # x_ref  : (C_in, NL)          compute_dtype, batch folded in lanes
            # w_ref  : (2*C_out, K*C_in)   compute_dtype, [real; imag] stacked
            # b_ref  : (2*C_out, 1)        f32
            # out_ref: (C_out, NL)         f32
            x_t = x_ref[...]
            # Column index within its own sequence (tiles are L-aligned).
            cols = jax.lax.broadcasted_iota(jnp.int32, (C_in, NL), 1) % L

            # Build the (K*C_in, NL) shifted-input slab: one lane roll (XLU)
            # + mask per tap; masking zeroes both the conv zero-padding and
            # any cross-sequence wrap inside the folded tile.
            taps = []
            for k in range(K):
                off = k - pad
                if off == 0:
                    shifted = x_t
                else:
                    shifted = pltpu.roll(x_t, shift=(-off) % NL, axis=1)
                valid = jnp.logical_and(cols + off >= 0, cols + off < L)
                taps.append(jnp.where(valid, shifted, jnp.zeros_like(shifted)))
            slab = jnp.concatenate(taps, axis=0)        # (K*C_in, NL)

            # Single fused MXU matmul (real+imag), f32 accumulate.
            acc = jnp.dot(w_ref[...], slab,
                          preferred_element_type=jnp.float32)  # (2*C_out, NL)
            acc = acc + b_ref[...]                       # bias broadcast over L

            re = acc[:C_out, :]
            im = acc[C_out:, :]
            out_ref[...] = jnp.sqrt(re * re + im * im)

        # ---- wrapper-side layout plumbing (no extra compute) ----
        # Fold batch into the lane axis: (N, C_in, L) -> (C_in, N*L)
        xf = jnp.transpose(x, (1, 0, 2)).reshape(C_in, N * L)
        xf = xf.astype(compute_dtype)

        # Stack real/imag along C_out and make the lane axis dense:
        # (2*C_out, C_in, K) -> (2*C_out, K, C_in) -> (2*C_out, K*C_in)
        w = jnp.concatenate([w_real, w_imag], axis=0)
        w = jnp.transpose(w, (0, 2, 1)).reshape(2 * C_out, K * C_in)
        w = w.astype(compute_dtype)

        b = jnp.concatenate([b_real, b_imag], axis=0).reshape(2 * C_out, 1)
        b = b.astype(jnp.float32)

        y = pl.pallas_call(
            kernel,
            out_shape=jax.ShapeDtypeStruct((C_out, N * L), jnp.float32),
            grid_spec=pltpu.PrefetchScalarGridSpec(
                num_scalar_prefetch=0,
                grid=grid,
                in_specs=[
                    pl.BlockSpec((C_in, NL), lambda t: (0, t)),
                    pl.BlockSpec((2 * C_out, K * C_in), lambda t: (0, 0)),
                    pl.BlockSpec((2 * C_out, 1), lambda t: (0, 0)),
                ],
                out_specs=pl.BlockSpec((C_out, NL), lambda t: (0, t)),
            ),
            compiler_params=pltpu.CompilerParams(
                dimension_semantics=("parallel",)),
        )(xf, w, b)

        # Unfold: (C_out, N*L) -> (N, C_out, L)
        return jnp.transpose(y.reshape(C_out, N, L), (1, 0, 2))

    return forward


def _ref_forward(x, w_real, w_imag, b_real, b_imag, pad):
    """Pure-JAX reference (lax conv) for correctness check."""
    dn = jax.lax.conv_dimension_numbers(x.shape, w_real.shape,
                                        ("NCH", "OIH", "NCH"))
    yr = jax.lax.conv_general_dilated(x, w_real, (1,), [(pad, pad)],
                                      dimension_numbers=dn)
    yi = jax.lax.conv_general_dilated(x, w_imag, (1,), [(pad, pad)],
                                      dimension_numbers=dn)
    yr = yr + b_real[None, :, None]
    yi = yi + b_imag[None, :, None]
    return jnp.sqrt(yr ** 2 + yi ** 2)


if __name__ == "__main__":
    # Small shapes consistent with the module's forward.
    N, C_in, C_out, L = 2, 4, 8, 16
    K, pad = 11, 5

    key = jax.random.PRNGKey(0)
    kx, kwr, kwi, kbr, kbi = jax.random.split(key, 5)

    # nn.Conv1d-style init: U(-bound, bound), bound = 1/sqrt(C_in * K)
    bound = 1.0 / (C_in * K) ** 0.5
    x = jax.random.normal(kx, (N, C_in, L), jnp.float32)
    w_real = jax.random.uniform(kwr, (C_out, C_in, K), jnp.float32, -bound, bound)
    w_imag = jax.random.uniform(kwi, (C_out, C_in, K), jnp.float32, -bound, bound)
    b_real = jax.random.uniform(kbr, (C_out,), jnp.float32, -bound, bound)
    b_imag = jax.random.uniform(kbi, (C_out,), jnp.float32, -bound, bound)

    ref = _ref_forward(x, w_real, w_imag, b_real, b_imag, pad)

    # f32 compute path: tight check against the lax.conv reference.
    fwd_f32 = make_phase_aware_conv1d(C_in, C_out, K, pad,
                                      compute_dtype=jnp.float32)
    out_f32 = fwd_f32(x, w_real, w_imag, b_real, b_imag)
    jax.block_until_ready(out_f32)
    assert out_f32.shape == (N, C_out, L)
    assert jnp.allclose(out_f32, ref, atol=1e-5, rtol=1e-5), \
        "f32 path mismatch vs reference"

    # bf16 compute path (v6e/v7x MXU fast path), f32 accumulation.
    fwd_bf16 = make_phase_aware_conv1d(C_in, C_out, K, pad,
                                       compute_dtype=jnp.bfloat16)
    out_bf16 = fwd_bf16(x, w_real, w_imag, b_real, b_imag)
    jax.block_until_ready(out_bf16)
    assert out_bf16.shape == (N, C_out, L)
    assert jnp.allclose(out_bf16, ref, atol=5e-2, rtol=5e-2), \
        "bf16 path mismatch vs reference"

    print("KERNEL_OK")
</pallas_src>

<mosaic_0001>
module attributes {stable_mosaic.version = 11 : i64} {
  func.func @kernel(%arg0: i32, %arg1: memref<4x32xf32, #tpu.memory_space<vmem>>, %arg2: memref<16x44xf32, #tpu.memory_space<vmem>>, %arg3: memref<16x1xf32, #tpu.memory_space<vmem>>, %arg4: memref<8x32xf32, #tpu.memory_space<vmem>>) attributes {dimension_semantics = [#tpu.dimension_semantics<parallel>], iteration_bounds = array<i64: 1>, scalar_prefetch = 0 : i64, scratch_operands = 0 : i64, tpu.core_type = #tpu.core_type<tc>, window_params = [{transform_indices = @transform_0, window_bounds = array<i64: 4, 32>}, {pipeline_mode = #tpu.pipeline_mode<synchronous>, transform_indices = @transform_1, window_bounds = array<i64: 16, 44>}, {pipeline_mode = #tpu.pipeline_mode<synchronous>, transform_indices = @transform_2, window_bounds = array<i64: 16, 1>}, {transform_indices = @transform_3, window_bounds = array<i64: 8, 32>}]} {
    %c0 = arith.constant 0 : index
    %c0_0 = arith.constant 0 : index
    %0 = vector.load %arg1[%c0, %c0_0] : memref<4x32xf32, #tpu.memory_space<vmem>>, vector<4x32xf32>
    %1 = tpu.iota {dimensions = array<i32: 1>} : vector<4x32xi32>
    %c16_i32 = arith.constant 16 : i32
    %c0_i32 = arith.constant 0 : i32
    %2 = arith.cmpi eq, %c16_i32, %c0_i32 : i32
    %c1_i32 = arith.constant 1 : i32
    %3 = arith.select %2, %c1_i32, %c16_i32 : i32
    %4 = vector.broadcast %3 : i32 to vector<4x32xi32>
    %5 = arith.remsi %1, %4 : vector<4x32xi32>
    %c0_i32_1 = arith.constant 0 : i32
    %6 = vector.broadcast %c0_i32_1 : i32 to vector<4x32xi32>
    %7 = arith.cmpi ne, %5, %6 : vector<4x32xi32>
    %c0_i32_2 = arith.constant 0 : i32
    %8 = vector.broadcast %c0_i32_2 : i32 to vector<4x32xi32>
    %9 = arith.cmpi slt, %5, %8 : vector<4x32xi32>
    %c0_i32_3 = arith.constant 0 : i32
    %10 = arith.cmpi slt, %3, %c0_i32_3 : i32
    %11 = vector.broadcast %10 : i1 to vector<4x32xi1>
    %12 = vector.broadcast %11 : vector<4x32xi1> to vector<4x32xi1>
    %13 = arith.xori %9, %12 : vector<4x32xi1>
    %14 = arith.andi %13, %7 : vector<4x32xi1>
    %15 = vector.broadcast %3 : i32 to vector<4x32xi32>
    %16 = arith.addi %5, %15 : vector<4x32xi32>
    %17 = arith.select %14, %16, %5 : vector<4x32xi1>, vector<4x32xi32>
    %c5_i32 = arith.constant 5 : i32
    %18 = tpu.dynamic_rotate %0 by %c5_i32 dim 1 : vector<4x32xf32>, i32 -> vector<4x32xf32>
    %c-5_i32 = arith.constant -5 : i32
    %19 = vector.broadcast %c-5_i32 : i32 to vector<4x32xi32>
    %20 = arith.addi %17, %19 : vector<4x32xi32>
    %c0_i32_4 = arith.constant 0 : i32
    %21 = vector.broadcast %c0_i32_4 : i32 to vector<4x32xi32>
    %22 = arith.cmpi sge, %20, %21 : vector<4x32xi32>
    %c-5_i32_5 = arith.constant -5 : i32
    %23 = vector.broadcast %c-5_i32_5 : i32 to vector<4x32xi32>
    %24 = arith.addi %17, %23 : vector<4x32xi32>
    %c16_i32_6 = arith.constant 16 : i32
    %25 = vector.broadcast %c16_i32_6 : i32 to vector<4x32xi32>
    %26 = arith.cmpi slt, %24, %25 : vector<4x32xi32>
    %27 = arith.andi %22, %26 : vector<4x32xi1>
    %cst = arith.constant 0.000000e+00 : f32
    %28 = vector.broadcast %cst : f32 to vector<4x32xf32>
    %29 = arith.select %27, %18, %28 : vector<4x32xi1>, vector<4x32xf32>
    %c4_i32 = arith.constant 4 : i32
    %30 = tpu.dynamic_rotate %0 by %c4_i32 dim 1 : vector<4x32xf32>, i32 -> vector<4x32xf32>
    %c-4_i32 = arith.constant -4 : i32
    %31 = vector.broadcast %c-4_i32 : i32 to vector<4x32xi32>
    %32 = arith.addi %17, %31 : vector<4x32xi32>
    %c0_i32_7 = arith.constant 0 : i32
    %33 = vector.broadcast %c0_i32_7 : i32 to vector<4x32xi32>
    %34 = arith.cmpi sge, %32, %33 : vector<4x32xi32>
    %c-4_i32_8 = arith.constant -4 : i32
    %35 = vector.broadcast %c-4_i32_8 : i32 to vector<4x32xi32>
    %36 = arith.addi %17, %35 : vector<4x32xi32>
    %c16_i32_9 = arith.constant 16 : i32
    %37 = vector.broadcast %c16_i32_9 : i32 to vector<4x32xi32>
    %38 = arith.cmpi slt, %36, %37 : vector<4x32xi32>
    %39 = arith.andi %34, %38 : vector<4x32xi1>
    %cst_10 = arith.constant 0.000000e+00 : f32
    %40 = vector.broadcast %cst_10 : f32 to vector<4x32xf32>
    %41 = arith.select %39, %30, %40 : vector<4x32xi1>, vector<4x32xf32>
    %c3_i32 = arith.constant 3 : i32
    %42 = tpu.dynamic_rotate %0 by %c3_i32 dim 1 : vector<4x32xf32>, i32 -> vector<4x32xf32>
    %c-3_i32 = arith.constant -3 : i32
    %43 = vector.broadcast %c-3_i32 : i32 to vector<4x32xi32>
    %44 = arith.addi %17, %43 : vector<4x32xi32>
    %c0_i32_11 = arith.constant 0 : i32
    %45 = vector.broadcast %c0_i32_11 : i32 to vector<4x32xi32>
    %46 = arith.cmpi sge, %44, %45 : vector<4x32xi32>
    %c-3_i32_12 = arith.constant -3 : i32
    %47 = vector.broadcast %c-3_i32_12 : i32 to vector<4x32xi32>
    %48 = arith.addi %17, %47 : vector<4x32xi32>
    %c16_i32_13 = arith.constant 16 : i32
    %49 = vector.broadcast %c16_i32_13 : i32 to vector<4x32xi32>
    %50 = arith.cmpi slt, %48, %49 : vector<4x32xi32>
    %51 = arith.andi %46, %50 : vector<4x32xi1>
    %cst_14 = arith.constant 0.000000e+00 : f32
    %52 = vector.broadcast %cst_14 : f32 to vector<4x32xf32>
    %53 = arith.select %51, %42, %52 : vector<4x32xi1>, vector<4x32xf32>
    %c2_i32 = arith.constant 2 : i32
    %54 = tpu.dynamic_rotate %0 by %c2_i32 dim 1 : vector<4x32xf32>, i32 -> vector<4x32xf32>
    %c-2_i32 = arith.constant -2 : i32
    %55 = vector.broadcast %c-2_i32 : i32 to vector<4x32xi32>
    %56 = arith.addi %17, %55 : vector<4x32xi32>
    %c0_i32_15 = arith.constant 0 : i32
    %57 = vector.broadcast %c0_i32_15 : i32 to vector<4x32xi32>
    %58 = arith.cmpi sge, %56, %57 : vector<4x32xi32>
    %c-2_i32_16 = arith.constant -2 : i32
    %59 = vector.broadcast %c-2_i32_16 : i32 to vector<4x32xi32>
    %60 = arith.addi %17, %59 : vector<4x32xi32>
    %c16_i32_17 = arith.constant 16 : i32
    %61 = vector.broadcast %c16_i32_17 : i32 to vector<4x32xi32>
    %62 = arith.cmpi slt, %60, %61 : vector<4x32xi32>
    %63 = arith.andi %58, %62 : vector<4x32xi1>
    %cst_18 = arith.constant 0.000000e+00 : f32
    %64 = vector.broadcast %cst_18 : f32 to vector<4x32xf32>
    %65 = arith.select %63, %54, %64 : vector<4x32xi1>, vector<4x32xf32>
    %c1_i32_19 = arith.constant 1 : i32
    %66 = tpu.dynamic_rotate %0 by %c1_i32_19 dim 1 : vector<4x32xf32>, i32 -> vector<4x32xf32>
    %c-1_i32 = arith.constant -1 : i32
    %67 = vector.broadcast %c-1_i32 : i32 to vector<4x32xi32>
    %68 = arith.addi %17, %67 : vector<4x32xi32>
    %c0_i32_20 = arith.constant 0 : i32
    %69 = vector.broadcast %c0_i32_20 : i32 to vector<4x32xi32>
    %70 = arith.cmpi sge, %68, %69 : vector<4x32xi32>
    %c-1_i32_21 = arith.constant -1 : i32
    %71 = vector.broadcast %c-1_i32_21 : i32 to vector<4x32xi32>
    %72 = arith.addi %17, %71 : vector<4x32xi32>
    %c16_i32_22 = arith.constant 16 : i32
    %73 = vector.broadcast %c16_i32_22 : i32 to vector<4x32xi32>
    %74 = arith.cmpi slt, %72, %73 : vector<4x32xi32>
    %75 = arith.andi %70, %74 : vector<4x32xi1>
    %cst_23 = arith.constant 0.000000e+00 : f32
    %76 = vector.broadcast %cst_23 : f32 to vector<4x32xf32>
    %77 = arith.select %75, %66, %76 : vector<4x32xi1>, vector<4x32xf32>
    %c0_i32_24 = arith.constant 0 : i32
    %78 = vector.broadcast %c0_i32_24 : i32 to vector<4x32xi32>
    %79 = arith.addi %17, %78 : vector<4x32xi32>
    %c0_i32_25 = arith.constant 0 : i32
    %80 = vector.broadcast %c0_i32_25 : i32 to vector<4x32xi32>
    %81 = arith.cmpi sge, %79, %80 : vector<4x32xi32>
    %c0_i32_26 = arith.constant 0 : i32
    %82 = vector.broadcast %c0_i32_26 : i32 to vector<4x32xi32>
    %83 = arith.addi %17, %82 : vector<4x32xi32>
    %c16_i32_27 = arith.constant 16 : i32
    %84 = vector.broadcast %c16_i32_27 : i32 to vector<4x32xi32>
    %85 = arith.cmpi slt, %83, %84 : vector<4x32xi32>
    %86 = arith.andi %81, %85 : vector<4x32xi1>
    %cst_28 = arith.constant 0.000000e+00 : f32
    %87 = vector.broadcast %cst_28 : f32 to vector<4x32xf32>
    %88 = arith.select %86, %0, %87 : vector<4x32xi1>, vector<4x32xf32>
    %c31_i32 = arith.constant 31 : i32
    %89 = tpu.dynamic_rotate %0 by %c31_i32 dim 1 : vector<4x32xf32>, i32 -> vector<4x32xf32>
    %c1_i32_29 = arith.constant 1 : i32
    %90 = vector.broadcast %c1_i32_29 : i32 to vector<4x32xi32>
    %91 = arith.addi %17, %90 : vector<4x32xi32>
    %c0_i32_30 = arith.constant 0 : i32
    %92 = vector.broadcast %c0_i32_30 : i32 to vector<4x32xi32>
    %93 = arith.cmpi sge, %91, %92 : vector<4x32xi32>
    %c1_i32_31 = arith.constant 1 : i32
    %94 = vector.broadcast %c1_i32_31 : i32 to vector<4x32xi32>
    %95 = arith.addi %17, %94 : vector<4x32xi32>
    %c16_i32_32 = arith.constant 16 : i32
    %96 = vector.broadcast %c16_i32_32 : i32 to vector<4x32xi32>
    %97 = arith.cmpi slt, %95, %96 : vector<4x32xi32>
    %98 = arith.andi %93, %97 : vector<4x32xi1>
    %cst_33 = arith.constant 0.000000e+00 : f32
    %99 = vector.broadcast %cst_33 : f32 to vector<4x32xf32>
    %100 = arith.select %98, %89, %99 : vector<4x32xi1>, vector<4x32xf32>
    %c30_i32 = arith.constant 30 : i32
    %101 = tpu.dynamic_rotate %0 by %c30_i32 dim 1 : vector<4x32xf32>, i32 -> vector<4x32xf32>
    %c2_i32_34 = arith.constant 2 : i32
    %102 = vector.broadcast %c2_i32_34 : i32 to vector<4x32xi32>
    %103 = arith.addi %17, %102 : vector<4x32xi32>
    %c0_i32_35 = arith.constant 0 : i32
    %104 = vector.broadcast %c0_i32_35 : i32 to vector<4x32xi32>
    %105 = arith.cmpi sge, %103, %104 : vector<4x32xi32>
    %c2_i32_36 = arith.constant 2 : i32
    %106 = vector.broadcast %c2_i32_36 : i32 to vector<4x32xi32>
    %107 = arith.addi %17, %106 : vector<4x32xi32>
    %c16_i32_37 = arith.constant 16 : i32
    %108 = vector.broadcast %c16_i32_37 : i32 to vector<4x32xi32>
    %109 = arith.cmpi slt, %107, %108 : vector<4x32xi32>
    %110 = arith.andi %105, %109 : vector<4x32xi1>
    %cst_38 = arith.constant 0.000000e+00 : f32
    %111 = vector.broadcast %cst_38 : f32 to vector<4x32xf32>
    %112 = arith.select %110, %101, %111 : vector<4x32xi1>, vector<4x32xf32>
    %c29_i32 = arith.constant 29 : i32
    %113 = tpu.dynamic_rotate %0 by %c29_i32 dim 1 : vector<4x32xf32>, i32 -> vector<4x32xf32>
    %c3_i32_39 = arith.constant 3 : i32
    %114 = vector.broadcast %c3_i32_39 : i32 to vector<4x32xi32>
    %115 = arith.addi %17, %114 : vector<4x32xi32>
    %c0_i32_40 = arith.constant 0 : i32
    %116 = vector.broadcast %c0_i32_40 : i32 to vector<4x32xi32>
    %117 = arith.cmpi sge, %115, %116 : vector<4x32xi32>
    %c3_i32_41 = arith.constant 3 : i32
    %118 = vector.broadcast %c3_i32_41 : i32 to vector<4x32xi32>
    %119 = arith.addi %17, %118 : vector<4x32xi32>
    %c16_i32_42 = arith.constant 16 : i32
    %120 = vector.broadcast %c16_i32_42 : i32 to vector<4x32xi32>
    %121 = arith.cmpi slt, %119, %120 : vector<4x32xi32>
    %122 = arith.andi %117, %121 : vector<4x32xi1>
    %cst_43 = arith.constant 0.000000e+00 : f32
    %123 = vector.broadcast %cst_43 : f32 to vector<4x32xf32>
    %124 = arith.select %122, %113, %123 : vector<4x32xi1>, vector<4x32xf32>
    %c28_i32 = arith.constant 28 : i32
    %125 = tpu.dynamic_rotate %0 by %c28_i32 dim 1 : vector<4x32xf32>, i32 -> vector<4x32xf32>
    %c4_i32_44 = arith.constant 4 : i32
    %126 = vector.broadcast %c4_i32_44 : i32 to vector<4x32xi32>
    %127 = arith.addi %17, %126 : vector<4x32xi32>
    %c0_i32_45 = arith.constant 0 : i32
    %128 = vector.broadcast %c0_i32_45 : i32 to vector<4x32xi32>
    %129 = arith.cmpi sge, %127, %128 : vector<4x32xi32>
    %c4_i32_46 = arith.constant 4 : i32
    %130 = vector.broadcast %c4_i32_46 : i32 to vector<4x32xi32>
    %131 = arith.addi %17, %130 : vector<4x32xi32>
    %c16_i32_47 = arith.constant 16 : i32
    %132 = vector.broadcast %c16_i32_47 : i32 to vector<4x32xi32>
    %133 = arith.cmpi slt, %131, %132 : vector<4x32xi32>
    %134 = arith.andi %129, %133 : vector<4x32xi1>
    %cst_48 = arith.constant 0.000000e+00 : f32
    %135 = vector.broadcast %cst_48 : f32 to vector<4x32xf32>
    %136 = arith.select %134, %125, %135 : vector<4x32xi1>, vector<4x32xf32>
    %c27_i32 = arith.constant 27 : i32
    %137 = tpu.dynamic_rotate %0 by %c27_i32 dim 1 : vector<4x32xf32>, i32 -> vector<4x32xf32>
    %c5_i32_49 = arith.constant 5 : i32
    %138 = vector.broadcast %c5_i32_49 : i32 to vector<4x32xi32>
    %139 = arith.addi %17, %138 : vector<4x32xi32>
    %c0_i32_50 = arith.constant 0 : i32
    %140 = vector.broadcast %c0_i32_50 : i32 to vector<4x32xi32>
    %141 = arith.cmpi sge, %139, %140 : vector<4x32xi32>
    %c5_i32_51 = arith.constant 5 : i32
    %142 = vector.broadcast %c5_i32_51 : i32 to vector<4x32xi32>
    %143 = arith.addi %17, %142 : vector<4x32xi32>
    %c16_i32_52 = arith.constant 16 : i32
    %144 = vector.broadcast %c16_i32_52 : i32 to vector<4x32xi32>
    %145 = arith.cmpi slt, %143, %144 : vector<4x32xi32>
    %146 = arith.andi %141, %145 : vector<4x32xi1>
    %cst_53 = arith.constant 0.000000e+00 : f32
    %147 = vector.broadcast %cst_53 : f32 to vector<4x32xf32>
    %148 = arith.select %146, %137, %147 : vector<4x32xi1>, vector<4x32xf32>
    %149 = tpu.concatenate %29, %41, %53, %65, %77, %88, %100, %112, %124, %136, %148 in 0 : vector<4x32xf32>, vector<4x32xf32>, vector<4x32xf32>, vector<4x32xf32>, vector<4x32xf32>, vector<4x32xf32>, vector<4x32xf32>, vector<4x32xf32>, vector<4x32xf32>, vector<4x32xf32>, vector<4x32xf32> -> vector<44x32xf32>
    %c0_54 = arith.constant 0 : index
    %c0_55 = arith.constant 0 : index
    %150 = vector.load %arg2[%c0_54, %c0_55] : memref<16x44xf32, #tpu.memory_space<vmem>>, vector<16x44xf32>
    %cst_56 = arith.constant dense<0.000000e+00> : vector<16x32xf32>
    %151 = tpu.matmul %150, %149, %cst_56 {dimension_numbers = #tpu.dot_dimension_numbers<[1], [0], [0], [1], [0, 0, 1, 1], [], []>} : vector<16x44xf32>, vector<44x32xf32>, vector<16x32xf32> -> vector<16x32xf32>
    %c0_57 = arith.constant 0 : index
    %c0_58 = arith.constant 0 : index
    %152 = vector.load %arg3[%c0_57, %c0_58] : memref<16x1xf32, #tpu.memory_space<vmem>>, vector<16x1xf32>
    %153 = vector.broadcast %152 : vector<16x1xf32> to vector<16x32xf32>
    %154 = arith.addf %151, %153 : vector<16x32xf32>
    %155 = vector.extract_strided_slice %154 {offsets = [0, 0], sizes = [8, 32], strides = [1, 1]} : vector<16x32xf32> to vector<8x32xf32>
    %156 = vector.extract_strided_slice %154 {offsets = [8, 0], sizes = [8, 32], strides = [1, 1]} : vector<16x32xf32> to vector<8x32xf32>
    %157 = arith.mulf %155, %155 : vector<8x32xf32>
    %158 = arith.mulf %156, %156 : vector<8x32xf32>
    %159 = arith.addf %157, %158 : vector<8x32xf32>
    %160 = math.sqrt %159 : vector<8x32xf32>
    %c0_59 = arith.constant 0 : index
    %c0_60 = arith.constant 0 : index
    %161 = vector.load %arg4[%c0_59, %c0_60] : memref<8x32xf32, #tpu.memory_space<vmem>>, vector<8x32xf32>
    tpu.vector_store %arg4[%c0_59, %c0_60], %160 {strides = array<i32>} : memref<8x32xf32, #tpu.memory_space<vmem>>, vector<8x32xf32>,
    return
  }
  func.func @transform_0(%arg0: i32) -> (i32, i32) {
    %c0_i32 = arith.constant 0 : i32
    %c0_i32_0 = arith.constant 0 : i32
    return %c0_i32, %arg0 : i32, i32
  }
  func.func @transform_1(%arg0: i32) -> (i32, i32) {
    %c0_i32 = arith.constant 0 : i32
    %c0_i32_0 = arith.constant 0 : i32
    %c0_i32_1 = arith.constant 0 : i32
    return %c0_i32, %c0_i32_0 : i32, i32
  }
  func.func @transform_2(%arg0: i32) -> (i32, i32) {
    %c0_i32 = arith.constant 0 : i32
    %c0_i32_0 = arith.constant 0 : i32
    %c0_i32_1 = arith.constant 0 : i32
    return %c0_i32, %c0_i32_0 : i32, i32
  }
  func.func @transform_3(%arg0: i32) -> (i32, i32) {
    %c0_i32 = arith.constant 0 : i32
    %c0_i32_0 = arith.constant 0 : i32
    return %c0_i32, %arg0 : i32, i32
  }
}

</mosaic_0001>

<llo_original>
// kernel: tpu_custom_call.1
$region0: #{tpu_custom_call.1}
  #allocation0 [shape = 'u32[]', space=smem, size = 0x4, offset = 0x4, fixed_abs, tag = 'smem constant byte address 0x4 - core index']
  #allocation1 [shape = 'u32[72,128]{1,0:T(1,128)}', space=vmem, size = 0x9000, scoped, tag = 'internal scratch']
  %s0 = inlined_call_operand.hbm [shape: f32[4,32], index: 0, kind: input, shape index: {}]
  %s1 = inlined_call_operand.vmem [shape: f32[16,44], index: 1, kind: input, shape index: {}]
  %s2 = inlined_call_operand.vmem [shape: f32[16,1], index: 2, kind: input, shape index: {}]
  %s3 = inlined_call_operand.hbm [shape: f32[8,32], index: 3, kind: output, shape index: {}]
  %s4 = sld [smem:[#allocation0]]
  $region26: #{tpu_custom_call.1} parent=0
    _
  %s6 = ssub.s32 1, %s4
  %s7 = scalar_select 0, %s6, %s4
  $region1: #{tpu_custom_call.1} parent=0
    #allocation2 [shape = 'u8[2048]{0}', space=vmem, size = 0x800, scoped, tag = 'input window, operand 0, single buffered']
    #allocation3 [shape = 's32[1]{0}', space=sflag, size = 0x4, scoped, tag = 'scoped memory for tpu_custom_call.1']
    #allocation4 [shape = 's32[1]{0}', space=sflag, size = 0x4, scoped, tag = 'scoped memory for tpu_custom_call.1']
    #allocation5 [shape = 'u8[4096]{0}', space=vmem, size = 0x1000, scoped, tag = 'output window, operand 0, single buffered']
    %8 = vsyncpa [#allocation3], 0
    %9 = vsyncpa [#allocation4], 0
    // Predicated region
    $region2: #{tpu_custom_call.1} parent=1 // pred_check
      _
    $region3: #{tpu_custom_call.1} parent=1 // pred_check_branch
      %11 = sbr.rel (0) target = $region5
    $region4: #{tpu_custom_call.1} parent=1 // pred_region
      %13 = vsyncadd [#allocation3], 0
      %s15 = sshll.u32 %s0, 4
      %s16 = int_to_ptr.hbm [resolvable:$true] %s15
      %s17 = sshll.u32 [#allocation2], 4
      %s18 = int_to_ptr.vmem [resolvable:$true] %s17
      %20 = dma.hbm_to_vmem [thread:$0]  %s16, 64, %s18, [#allocation3]
    $region5: #{tpu_custom_call.1} parent=1 // pred_fallthru
      _
    // Predicated region
    $region6: #{tpu_custom_call.1} parent=1 // pred_check
      _
    $region7: #{tpu_custom_call.1} parent=1 // pred_check_branch
      %22 = sbr.rel (0) target = $region9
    $region8: #{tpu_custom_call.1} parent=1 // pred_region
      _
    $region9: #{tpu_custom_call.1} parent=1 // pred_fallthru
      _
    // Predicated region
    $region10: #{tpu_custom_call.1} parent=1 // pred_check
      _
    $region11: #{tpu_custom_call.1} parent=1 // pred_check_branch
      %24 = sbr.rel (0) target = $region13
    $region12: #{tpu_custom_call.1} parent=1 // pred_region
      _
    $region13: #{tpu_custom_call.1} parent=1 // pred_fallthru
      _
    // Predicated region
    $region14: #{tpu_custom_call.1} parent=1 // pred_check
      _
    $region15: #{tpu_custom_call.1} parent=1 // pred_check_branch
      %26 = sbr.rel (0) target = $region17
    $region16: #{tpu_custom_call.1} parent=1 // pred_region
      %28 = dma.done [#allocation3], 64
    $region17: #{tpu_custom_call.1} parent=1 // pred_fallthru
      _
    %v29 = vld [vmem:[#allocation2] sm:$0xf]
    %v30 = vlaneseq
    %v31 = vand.u32 %v30, 127
    %vm32 = vcmp.lt.s32.totalorder %v31, 0
    %v33 = vsub.s32 0, %v31
    %v34 = vsel %vm32, %v33, %v31
    %v35 = vshrl.u32 %v34, 4
    %v36 = vand.u32 %v34, 15
    %v37 = vsub.s32 0, %v36
    %v38 = vsel %vm32, %v37, %v36
    %vm39 = vcmp.ne.s32.totalorder %v38, 0
    %vm40 = vcmp.lt.s32.totalorder %v38, 0
    %vm41 = vmand %vm40, %vm39
    %v42 = vadd.s32 %v38, 16
    %v43 = vsel %vm41, %v42, %v38
    %vm44 = vcmask 1047808
    %45 = vrot.lane.b32.xlu0 %v29, 32
    %v46 = vpop.permute.xlu0 %45
    %v47 = vsel %vm44, %v46, %v29
    %48 = vrot.lane.b32.xlu0 %v47, 32
    %v49 = vpop.permute.xlu0 %48
    %v50 = vsel %vm44, %v49, %v29
    %v51 = vadd.s32 %v43, 4294967291
    %vm52 = vcmp.ge.s32.totalorder %v51, 0
    %vm53 = vcmp.lt.s32.totalorder %v51, 16
    %vm54 = vmand %vm52, %vm53
    %56 = vrot.lane.b32.xlu0 %v50, 101
    %v57 = vpop.permute.xlu0 %56
    %v59 = vsel %vm54, %v57, 0.0
    %v60 = vadd.s32 %v43, 4294967292
    %vm61 = vcmp.ge.s32.totalorder %v60, 0
    %vm62 = vcmp.lt.s32.totalorder %v60, 16
    %vm63 = vmand %vm61, %vm62
    %64 = vrot.lane.b32.xlu0 %v50, 100
    %v65 = vpop.permute.xlu0 %64
    %v67 = vsel %vm63, %v65, 0.0
    %v68 = vadd.s32 %v43, 4294967293
    %vm69 = vcmp.ge.s32.totalorder %v68, 0
    %vm70 = vcmp.lt.s32.totalorder %v68, 16
    %vm71 = vmand %vm69, %vm70
    %72 = vrot.lane.b32.xlu0 %v50, 99
    %v73 = vpop.permute.xlu0 %72
    %v75 = vsel %vm71, %v73, 0.0
    %v76 = vadd.s32 %v43, 4294967294
    %vm77 = vcmp.ge.s32.totalorder %v76, 0
    %vm78 = vcmp.lt.s32.totalorder %v76, 16
    %vm79 = vmand %vm77, %vm78
    %80 = vrot.lane.b32.xlu0 %v50, 98
    %v81 = vpop.permute.xlu0 %80
    %v83 = vsel %vm79, %v81, 0.0
    %v84 = vadd.s32 %v43, 4294967295
    %vm85 = vcmp.ge.s32.totalorder %v84, 0
    %vm86 = vcmp.lt.s32.totalorder %v84, 16
    %vm87 = vmand %vm85, %vm86
    %88 = vrot.lane.b32.xlu0 %v50, 97
    %v89 = vpop.permute.xlu0 %88
    %v91 = vsel %vm87, %v89, 0.0
    %vm92 = vcmp.ge.s32.totalorder %v43, 0
    %vm93 = vcmp.lt.s32.totalorder %v43, 16
    %vm94 = vmand %vm92, %vm93
    %v95 = vsel %vm94, %v29, 0.0
    %v96 = vadd.s32 %v43, 1
    %vm97 = vcmp.ge.s32.totalorder %v96, 0
    %vm98 = vcmp.lt.s32.totalorder %v96, 16
    %vm99 = vmand %vm97, %vm98
    %100 = vrot.lane.b32.xlu0 %v50, 127
    %v101 = vpop.permute.xlu0 %100
    %v103 = vsel %vm99, %v101, 0.0
    %v104 = vadd.s32 %v43, 2
    %vm105 = vcmp.ge.s32.totalorder %v104, 0
    %vm106 = vcmp.lt.s32.totalorder %v104, 16
    %vm107 = vmand %vm105, %vm106
    %108 = vrot.lane.b32.xlu0 %v50, 126
    %v109 = vpop.permute.xlu0 %108
    %v111 = vsel %vm107, %v109, 0.0
    %v112 = vadd.s32 %v43, 3
    %vm113 = vcmp.ge.s32.totalorder %v112, 0
    %vm114 = vcmp.lt.s32.totalorder %v112, 16
    %vm115 = vmand %vm113, %vm114
    %116 = vrot.lane.b32.xlu0 %v50, 125
    %v117 = vpop.permute.xlu0 %116
    %v119 = vsel %vm115, %v117, 0.0
    %v120 = vadd.s32 %v43, 4
    %vm121 = vcmp.ge.s32.totalorder %v120, 0
    %vm122 = vcmp.lt.s32.totalorder %v120, 16
    %vm123 = vmand %vm121, %vm122
    %124 = vrot.lane.b32.xlu0 %v50, 124
    %v125 = vpop.permute.xlu0 %124
    %v127 = vsel %vm123, %v125, 0.0
    %v128 = vadd.s32 %v43, 5
    %vm129 = vcmp.ge.s32.totalorder %v128, 0
    %vm130 = vcmp.lt.s32.totalorder %v128, 16
    %vm131 = vmand %vm129, %vm130
    %132 = vrot.lane.b32.xlu0 %v50, 123
    %v133 = vpop.permute.xlu0 %132
    %v135 = vsel %vm131, %v133, 0.0
    %v137 = vrot.slane %v67, 4
    %v140 = vrot.slane %v83, 4
    %v143 = vrot.slane %v95, 4
    %v146 = vrot.slane %v111, 4
    %v149 = vrot.slane %v127, 4
    %vm151 = vcmask 1043456
    %v152 = vsel %vm151, %v59, %v137
    %v153 = vsel %vm151, %v75, %v140
    %v154 = vsel %vm151, %v91, %v143
    %v155 = vsel %vm151, %v103, %v146
    %v156 = vsel %vm151, %v119, %v149
    %v157 = vld [vmem:[%s1] sm:$0xff]
    %v158 = vld [vmem:[%s1 + $0x8] sm:$0xff]
    %v159 = vld [vmem:[%s2] sm:$0xff]
    %v160 = vld [vmem:[%s2 + $0x8] sm:$0xff]
    %162 = vset.pattern.permute.xlu0 0
    %163 = vperm.xlu0 %162, %v159
    %v164 = vpop.permute.xlu0 %163
    %167 = vset.pattern.permute.xlu0 0
    %168 = vperm.xlu0 %167, %v160
    %v169 = vpop.permute.xlu0 %168
    %vm171 = vcmask 359424
    %v173 = vsel %vm171, %v157, 0
    %v176 = vsel %vm171, %v158, 0
    %v179 = vsel %vm151, %v135, 0
    %181 = vmatpush.msra.mxu0 0.0
    %182 = vmatpush.msra.mxu0 0.0
    %183 = vmatpush.msra.mxu0 0.0
    %184 = vmatpush.msra.mxu0 0.0
    %185 = vmatpush.msra.mxu0 0.0
    %186 = vmatpush.msra.mxu0 0.0
    %187 = vmatpush.msra.mxu0 0.0
    %188 = vmatpush.msra.mxu0 0.0
    %189 = vmatpush.msra.mxu0 0.0
    %190 = vmatpush.msra.mxu0 0.0
    %191 = vmatpush.msra.mxu0 %v179
    %192 = vmatpush.msra.mxu0 %v156
    %193 = vmatpush.msra.mxu0 %v155
    %194 = vmatpush.msra.mxu0 %v154
    %195 = vmatpush.msra.mxu0 %v153
    %196 = vmatpush.msra.mxu0 %v152
    %197 = vmatmul.f32.gmra.mxu0 %v173
    %v198 = vpop.f32.mrf.mxu0
    %v199 = vadd.f32 %v164, %v198
    %200 = vmatmul.f32.gmra.mxu0 %v176
    %v201 = vpop.f32.mrf.mxu0
    %v202 = vadd.f32 %v169, %v201
    %203 = vdwg.mxu0
    %v204 = vmul.f32 %v199, %v199
    %v205 = vmul.f32 %v202, %v202
    %v206 = vadd.f32 %v204, %v205
    %v207 = vrsqrt.pop %v206
    %v208 = vmul.f32 %v207, %v206
    %v209 = vmul.f32 %v208, %v207
    %v210 = vmul.f32 0.5, %v209
    %v211 = vsub.f32 1.5, %v210
    %v212 = vmul.f32 %v207, %v211
    %v213 = vmul.f32 %v206, %v212
    %vm214 = vcmp.eq.f32.partialorder %v206, inf
    %v215 = vsel %vm214, %v206, %v213
    %vm216 = vcmp.eq.f32.partialorder %v206, 0.0
    %v217 = vand.u32 %v206, 2147483648
    %v218 = vsel %vm216, %v217, %v215
    %vm219 = vcmask 261120
    %220 = vst.msk [vmem:[#allocation5] sm:$0xff] %vm219, %v218
    // Predicated region
    $region18: #{tpu_custom_call.1} parent=1 // pred_check
      _
    $region19: #{tpu_custom_call.1} parent=1 // pred_check_branch
      %222 = sbr.rel (0) target = $region21
    $region20: #{tpu_custom_call.1} parent=1 // pred_region
      %224 = vsyncadd [#allocation4], 0
      %s226 = sshll.u32 [#allocation5], 4
      %s227 = int_to_ptr.vmem [resolvable:$true] %s226
      %s228 = sshll.u32 %s3, 4
      %s229 = int_to_ptr.hbm [resolvable:$true] %s228
      %231 = dma.vmem_to_hbm [thread:$0]  %s227, 128, %s229, [#allocation4]
    $region21: #{tpu_custom_call.1} parent=1 // pred_fallthru
      _
    // Predicated region
    $region22: #{tpu_custom_call.1} parent=1 // pred_check
      _
    $region23: #{tpu_custom_call.1} parent=1 // pred_check_branch
      %233 = sbr.rel (0) target = $region25
    $region24: #{tpu_custom_call.1} parent=1 // pred_region
      %235 = dma.done [#allocation4], 128
    $region25: #{tpu_custom_call.1} parent=1 // pred_fallthru
      _
    %236 = vsyncpa [#allocation3], 1
    %237 = vsyncpa [#allocation4], 1

</llo_original>
